<compile_context>
chip_gen: v5e
topology: v5e:2x2
jax: 0.10.0
libtpu: 0.0.40
codegen_flags: <defaults>
</compile_context>

<pallas_src>
import math
from functools import partial

import jax
import jax.numpy as jnp
import numpy as np
from jax.experimental import pallas as pl
from jax.experimental.pallas import tpu as pltpu


# --------------------------------------------------------------------------
# Constant sinusoidal table (mirrors the PyTorch module's __init__ exactly).
# --------------------------------------------------------------------------
def build_sinusoidal_pe(d_model: int, max_len: int = 5000) -> jnp.ndarray:
    position = np.arange(0, max_len, dtype=np.float32)[:, None]
    div_term = np.exp(
        np.arange(0, d_model, 2, dtype=np.float32) * (-math.log(10000.0) / d_model)
    )
    pe = np.zeros((max_len, d_model), dtype=np.float32)
    pe[:, 0::2] = np.sin(position * div_term)
    pe[:, 1::2] = np.cos(position * div_term)
    return jnp.asarray(pe)


# --------------------------------------------------------------------------
# Kernels
# --------------------------------------------------------------------------
def _add_pe_whole_kernel(x_ref, pe_ref, out_ref):
    # x_ref/out_ref: (B, L, D) fully VMEM-resident; pe_ref: (L, D) broadcast over batch.
    out_ref[...] = x_ref[...] + pe_ref[...]


def _add_pe_tiled_kernel(x_ref, pe_ref, out_ref):
    # x_ref/out_ref: (1, tile_L, D); pe_ref: (tile_L, D) broadcast over the leading 1.
    out_ref[...] = x_ref[...] + pe_ref[...]


# --------------------------------------------------------------------------
# Wrappers
# --------------------------------------------------------------------------
@jax.jit
def _add_pe_small(x, pe_l):
    """Whole-array path: no grid, no pipelining, output aliases x."""
    return pl.pallas_call(
        _add_pe_whole_kernel,
        out_shape=jax.ShapeDtypeStruct(x.shape, x.dtype),
        in_specs=[
            pl.BlockSpec(memory_space=pltpu.MemorySpace.VMEM),
            pl.BlockSpec(memory_space=pltpu.MemorySpace.VMEM),
        ],
        out_specs=pl.BlockSpec(memory_space=pltpu.MemorySpace.VMEM),
        input_output_aliases={0: 0},  # out <- x buffer, no extra HBM allocation
    )(x, pe_l)


@partial(jax.jit, static_argnames=("tile_l",))
def _add_pe_tiled(x, pe, tile_l):
    """Generalized path: grid over (L tiles, batch); pe stays resident across batch."""
    b, l, d = x.shape
    grid = (pl.cdiv(l, tile_l), b)  # batch innermost -> pe block index constant across it
    return pl.pallas_call(
        _add_pe_tiled_kernel,
        out_shape=jax.ShapeDtypeStruct(x.shape, x.dtype),
        grid=grid,
        in_specs=[
            # x tile: one batch row, tile_l sequence positions, full D on the lane axis.
            pl.BlockSpec((1, tile_l, d), lambda li, bi: (bi, li, 0)),
            # pe tile: independent of the batch index -> not re-DMA'd per batch step.
            pl.BlockSpec((tile_l, d), lambda li, bi: (li, 0)),
        ],
        out_specs=pl.BlockSpec((1, tile_l, d), lambda li, bi: (bi, li, 0)),
        input_output_aliases={0: 0},
        compiler_params=pltpu.CompilerParams(
            # L tiles can be split across TensorCores (v7x megacore); batch stays
            # sequential so the resident pe tile is reused across it.
            dimension_semantics=("parallel", "arbitrary"),
        ),
    )(x, pe)


def _pick_tile_l(l, d, itemsize, target_block_bytes=2 << 20):
    """Multiple-of-8 sequence tile sized to ~2 MiB/block (fits every chip's scoped VMEM)."""
    if l <= 8:
        return l
    tile = min(l, max(8, target_block_bytes // max(1, d * itemsize)))
    tile = max(8, (tile // 8) * 8)
    # Prefer a tile that divides l exactly (avoids a ragged, masked last block).
    while tile > 8 and l % tile != 0:
        tile -= 8
    return tile


_SMALL_BYTES = 4 << 20  # whole-array path while x comfortably fits VMEM


class PositionalEncodingPallas:
    """Drop-in equivalent of the PyTorch PositionalEncoding module."""

    def __init__(self, d_model: int, max_len: int = 5000):
        self.d_model = d_model
        self.max_len = max_len
        self.pe = build_sinusoidal_pe(d_model, max_len)  # constant buffer
        self._pe_slices = {}  # cached per-seq-len slices (done once, outside jit)

    def _pe_for_len(self, seq_len: int):
        if seq_len not in self._pe_slices:
            self._pe_slices[seq_len] = self.pe[:seq_len]
        return self._pe_slices[seq_len]

    def __call__(self, x):
        b, l, d = x.shape
        assert d == self.d_model and l <= self.max_len
        if b * l * d * x.dtype.itemsize <= _SMALL_BYTES:
            return _add_pe_small(x, self._pe_for_len(l))
        tile_l = _pick_tile_l(l, d, x.dtype.itemsize)
        return _add_pe_tiled(x, self.pe, tile_l)


# --------------------------------------------------------------------------
# Main: small-shape check + a modest-shape check of the tiled path.
# --------------------------------------------------------------------------
if __name__ == "__main__":
    D_MODEL, MAX_LEN = 32, 5000
    B, L = 2, 8

    module = PositionalEncodingPallas(D_MODEL, MAX_LEN)

    key = jax.random.PRNGKey(0)
    x = jax.random.normal(key, (B, L, D_MODEL), jnp.float32)

    out = jax.block_until_ready(module(x))
    ref = x + module.pe[None, :L, :]
    np.testing.assert_allclose(np.asarray(out), np.asarray(ref), rtol=1e-6, atol=1e-6)

    # Also exercise the generalized tiled path directly at a modest, tile-friendly size.
    B2, L2, D2 = 2, 256, 128
    module2 = PositionalEncodingPallas(D2, MAX_LEN)
    x2 = jax.random.normal(jax.random.PRNGKey(0), (B2, L2, D2), jnp.float32)
    out2 = jax.block_until_ready(_add_pe_tiled(x2, module2.pe, tile_l=128))
    ref2 = x2 + module2.pe[None, :L2, :]
    np.testing.assert_allclose(np.asarray(out2), np.asarray(ref2), rtol=1e-6, atol=1e-6)

    print("KERNEL_OK")
</pallas_src>

<mosaic_0001>
module attributes {stable_mosaic.version = 11 : i64} {
  func.func @_add_pe_whole_kernel(%arg0: memref<2x8x32xf32, #tpu.memory_space<vmem>>, %arg1: memref<8x32xf32, #tpu.memory_space<vmem>>, %arg2: memref<2x8x32xf32, #tpu.memory_space<vmem>>) attributes {dimension_semantics = [], scalar_prefetch = 0 : i64, scratch_operands = 0 : i64, tpu.core_type = #tpu.core_type<tc>} {
    %c0 = arith.constant 0 : index
    %c0_0 = arith.constant 0 : index
    %c0_1 = arith.constant 0 : index
    %0 = vector.load %arg0[%c0, %c0_0, %c0_1] : memref<2x8x32xf32, #tpu.memory_space<vmem>>, vector<2x8x32xf32>
    %c0_2 = arith.constant 0 : index
    %c0_3 = arith.constant 0 : index
    %1 = vector.load %arg1[%c0_2, %c0_3] : memref<8x32xf32, #tpu.memory_space<vmem>>, vector<8x32xf32>
    %2 = vector.shape_cast %1 : vector<8x32xf32> to vector<1x8x32xf32>
    %3 = vector.broadcast %2 : vector<1x8x32xf32> to vector<2x8x32xf32>
    %4 = arith.addf %0, %3 : vector<2x8x32xf32>
    %c0_4 = arith.constant 0 : index
    %c0_5 = arith.constant 0 : index
    %c0_6 = arith.constant 0 : index
    %5 = vector.load %arg2[%c0_4, %c0_5, %c0_6] : memref<2x8x32xf32, #tpu.memory_space<vmem>>, vector<2x8x32xf32>
    tpu.vector_store %arg2[%c0_4, %c0_5, %c0_6], %4 {strides = array<i32>} : memref<2x8x32xf32, #tpu.memory_space<vmem>>, vector<2x8x32xf32>,
    return
  }
}

</mosaic_0001>

<llo_original>
// kernel: _add_pe_small.1
$region0: #{_add_pe_small.1}
  #allocation0 [shape = 'u32[]', space=smem, size = 0x4, offset = 0x4, fixed_abs, tag = 'smem constant byte address 0x4 - core index']
  #allocation1 [shape = 'u32[72,128]{1,0:T(1,128)}', space=vmem, size = 0x9000, scoped, tag = 'internal scratch']
  %s0 = inlined_call_operand.hbm [shape: f32[2,8,32], index: 0, kind: input, shape index: {}, may-alias: {0,2}]
  %s1 = inlined_call_operand.vmem [shape: f32[8,32], index: 1, kind: input, shape index: {}]
  %s2 = inlined_call_operand.hbm [shape: f32[2,8,32], index: 2, kind: output, shape index: {}, may-alias: {0,2}]
  %s3 = sld [smem:[#allocation0]]
  $region22: #{_add_pe_small.1} parent=0
    _
  %s5 = ssub.s32 1, %s3
  %s6 = scalar_select 0, %s5, %s3
  $region1: #{_add_pe_small.1} parent=0
    #allocation2 [shape = 'u8[8192]{0}', space=vmem, size = 0x2000, scoped, tag = 'input window, operand 0, single buffered']
    #allocation3 [shape = 's32[1]{0}', space=sflag, size = 0x4, scoped, tag = 'scoped memory for _add_pe_small.1']
    #allocation4 [shape = 's32[1]{0}', space=sflag, size = 0x4, scoped, tag = 'scoped memory for _add_pe_small.1']
    #allocation5 [shape = 'u8[8192]{0}', space=vmem, size = 0x2000, scoped, tag = 'output window, operand 0, single buffered']
    %7 = vsyncpa [#allocation3], 0
    %8 = vsyncpa [#allocation4], 0
    // Predicated region
    $region2: #{_add_pe_small.1} parent=1 // pred_check
      _
    $region3: #{_add_pe_small.1} parent=1 // pred_check_branch
      %10 = sbr.rel (0) target = $region5
    $region4: #{_add_pe_small.1} parent=1 // pred_region
      %12 = vsyncadd [#allocation3], 0
      %s13 = sshll.u32 %s0, 4
      %s14 = int_to_ptr.hbm [resolvable:$true] %s13
      %s15 = sshll.u32 [#allocation2], 4
      %s16 = int_to_ptr.vmem [resolvable:$true] %s15
      %21 = dma.hbm_to_vmem [thread:$0]  %s14, 256, %s16, [#allocation3], 128, 128, 8
    $region5: #{_add_pe_small.1} parent=1 // pred_fallthru
      _
    // Predicated region
    $region6: #{_add_pe_small.1} parent=1 // pred_check
      _
    $region7: #{_add_pe_small.1} parent=1 // pred_check_branch
      %23 = sbr.rel (0) target = $region9
    $region8: #{_add_pe_small.1} parent=1 // pred_region
      _
    $region9: #{_add_pe_small.1} parent=1 // pred_fallthru
      _
    // Predicated region
    $region10: #{_add_pe_small.1} parent=1 // pred_check
      _
    $region11: #{_add_pe_small.1} parent=1 // pred_check_branch
      %25 = sbr.rel (0) target = $region13
    $region12: #{_add_pe_small.1} parent=1 // pred_region
      %27 = dma.done [#allocation3], 256
    $region13: #{_add_pe_small.1} parent=1 // pred_fallthru
      _
    %v28 = vld [vmem:[#allocation2] sm:$0xff]
    %v29 = vld [vmem:[#allocation2 + $0x8] sm:$0xff]
    %v30 = vld [vmem:[%s1] sm:$0xff]
    %v31 = vadd.f32 %v28, %v30
    %v32 = vadd.f32 %v29, %v30
    %vm33 = vcmask 261120
    %34 = vst.msk [vmem:[#allocation5] sm:$0xff] %vm33, %v31
    %35 = vst.msk [vmem:[#allocation5 + $0x8] sm:$0xff] %vm33, %v32
    // Predicated region
    $region14: #{_add_pe_small.1} parent=1 // pred_check
      _
    $region15: #{_add_pe_small.1} parent=1 // pred_check_branch
      %37 = sbr.rel (0) target = $region17
    $region16: #{_add_pe_small.1} parent=1 // pred_region
      %39 = vsyncadd [#allocation4], 0
      %s40 = sshll.u32 [#allocation5], 4
      %s41 = int_to_ptr.vmem [resolvable:$true] %s40
      %s42 = sshll.u32 %s2, 4
      %s43 = int_to_ptr.hbm [resolvable:$true] %s42
      %48 = dma.vmem_to_hbm [thread:$0]  %s41, 256, %s43, [#allocation4], 128, 128, 8
    $region17: #{_add_pe_small.1} parent=1 // pred_fallthru
      _
    // Predicated region
    $region18: #{_add_pe_small.1} parent=1 // pred_check
      _
    $region19: #{_add_pe_small.1} parent=1 // pred_check_branch
      %50 = sbr.rel (0) target = $region21
    $region20: #{_add_pe_small.1} parent=1 // pred_region
      %52 = dma.done [#allocation4], 256
    $region21: #{_add_pe_small.1} parent=1 // pred_fallthru
      _
    %53 = vsyncpa [#allocation3], 1
    %54 = vsyncpa [#allocation4], 1

</llo_original>
